<compile_context>
chip_gen: v7x
topology: tpu7x:2x2x1
jax: 0.10.0
libtpu: 0.0.40
codegen_flags: <defaults>
</compile_context>

<pallas_src>
import jax
import jax.numpy as jnp
from jax.experimental import pallas as pl
from jax.experimental.pallas import tpu as pltpu


_LANES = 128
_SUBLANE_FOR_ITEMSIZE = {4: 8, 2: 16, 1: 32}   # itemsize -> sublane packing
_SINGLE_BLOCK_MAX_BYTES = 512 * 1024            # no-grid path only for small slabs
_DEFAULT_BLOCK_BYTES = 4 * 1024 * 1024          # fallback when get_tpu_info unavailable


def _swish_kernel(x_ref, o_ref):
    # One EUP transcendental per vreg; exact sigmoid (no approx reciprocal).
    xf = x_ref[...].astype(jnp.float32)
    sig = 0.5 * jnp.tanh(0.5 * xf) + 0.5
    o_ref[...] = (xf * sig).astype(o_ref.dtype)


def _swish_jnp(x):
    xf = x.astype(jnp.float32)
    return (xf * (0.5 * jnp.tanh(0.5 * xf) + 0.5)).astype(x.dtype)


def _pick_block_bytes():
    """Generation-aware block size target (bytes of input per grid step)."""
    try:
        info = pltpu.get_tpu_info()
        vmem = getattr(info, "vmem_capacity_bytes", None)
        if vmem:
            # 2 buffers x (in + out) x block must stay well under VMEM;
            # vmem/16 gives 4 MiB on v7x (64 MiB) and 8 MiB on v5e/v6e (128 MiB).
            return max(1 << 20, min(8 << 20, int(vmem) // 16))
    except Exception:
        pass
    return _DEFAULT_BLOCK_BYTES


def _swish_pallas_2d(x2d, block_bytes=None):
    """Run the kernel over a lane-dense (rows, 128) slab."""
    rows, lanes = x2d.shape
    dtype = x2d.dtype
    itemsize = jnp.dtype(dtype).itemsize
    sub = _SUBLANE_FOR_ITEMSIZE.get(itemsize, 8)
    slab_bytes = rows * lanes * itemsize

    if slab_bytes <= _SINGLE_BLOCK_MAX_BYTES:
        # Tiny slab: single block, no grid (launch dominated anyway).
        return pl.pallas_call(
            _swish_kernel,
            out_shape=jax.ShapeDtypeStruct((rows, lanes), dtype),
        )(x2d)

    if block_bytes is None:
        block_bytes = _pick_block_bytes()

    cap_rows = max(sub, ((block_bytes // (lanes * itemsize)) // sub) * sub)
    if cap_rows >= rows:
        tile_rows = rows            # block == full array (always legal)
        grid = (1,)
    else:
        tile_rows = cap_rows        # multiple of sublane; ragged last block is fine
        grid = (pl.cdiv(rows, tile_rows),)

    block_io_bytes = tile_rows * lanes * itemsize
    block_f32_bytes = tile_rows * lanes * 4
    # double-buffered in + out, plus f32 compute temporaries, plus slack.
    vmem_limit = 4 * block_io_bytes + 2 * block_f32_bytes + (4 << 20)

    return pl.pallas_call(
        _swish_kernel,
        out_shape=jax.ShapeDtypeStruct((rows, lanes), dtype),
        grid_spec=pltpu.PrefetchScalarGridSpec(
            num_scalar_prefetch=0,
            grid=grid,
            in_specs=[pl.BlockSpec((tile_rows, lanes), lambda i: (i, 0))],
            out_specs=pl.BlockSpec((tile_rows, lanes), lambda i: (i, 0)),
        ),
        compiler_params=pltpu.CompilerParams(
            dimension_semantics=("parallel",),
            vmem_limit_bytes=vmem_limit,
        ),
    )(x2d)


def swish(x, *, block_bytes=None):
    """Elementwise swish: x * sigmoid(x). Works for any shape/dtype."""
    orig_shape = x.shape
    n = x.size
    if n == 0:
        return x

    rows = n // _LANES
    aligned = rows * _LANES
    tail = n - aligned

    if aligned == 0:
        # Fewer than 128 elements: pure jnp is cheaper than any kernel launch.
        return _swish_jnp(x)

    if tail == 0:
        # Lane-aligned: free reshape, no extra HBM pass.
        out2d = _swish_pallas_2d(x.reshape(rows, _LANES), block_bytes)
        return out2d.reshape(orig_shape)

    # Ragged: kernel over the aligned prefix, plain jnp for the <128 elem tail.
    x_flat = x.reshape(-1)
    out2d = _swish_pallas_2d(x_flat[:aligned].reshape(rows, _LANES), block_bytes)
    tail_out = _swish_jnp(x_flat[aligned:])
    return jnp.concatenate([out2d.reshape(-1), tail_out]).reshape(orig_shape)


def _ref_swish(x):
    xf = x.astype(jnp.float32)
    return (xf * jax.nn.sigmoid(xf)).astype(x.dtype)


if __name__ == "__main__":
    key = jax.random.PRNGKey(0)

    # 1) Primary small NCHW case (matches the module's typical input):
    #    lane-aligned, single-block (no-grid) path.
    x = jax.random.normal(key, (2, 4, 16, 16), dtype=jnp.float32)
    out = jax.block_until_ready(swish(x))
    assert out.shape == x.shape and out.dtype == x.dtype
    assert jnp.allclose(out, _ref_swish(x), atol=1e-4, rtol=1e-4)

    # 2) Gridded (parallel, multi-step) path: force small blocks so the 1-D
    #    grid has several steps even at a modest size.
    k2 = jax.random.fold_in(key, 1)
    x2 = jax.random.normal(k2, (2, 4, 160, 128), dtype=jnp.float32)  # 640 KiB slab
    out2 = jax.block_until_ready(swish(x2, block_bytes=128 * 1024))
    assert out2.shape == x2.shape and out2.dtype == x2.dtype
    assert jnp.allclose(out2, _ref_swish(x2), atol=1e-4, rtol=1e-4)

    # 3) Ragged (non-lane-aligned) bf16 case: aligned-prefix kernel + jnp tail.
    k3 = jax.random.fold_in(key, 2)
    x3 = jax.random.normal(k3, (3, 5, 7, 11), dtype=jnp.bfloat16)
    out3 = jax.block_until_ready(swish(x3))
    assert out3.shape == x3.shape and out3.dtype == x3.dtype
    assert jnp.allclose(out3.astype(jnp.float32),
                        _ref_swish(x3).astype(jnp.float32),
                        atol=2e-2, rtol=2e-2)

    # 4) Sub-lane-width input (pure jnp fallback).
    k4 = jax.random.fold_in(key, 3)
    x4 = jax.random.normal(k4, (7,), dtype=jnp.float32)
    out4 = jax.block_until_ready(swish(x4))
    assert jnp.allclose(out4, _ref_swish(x4), atol=1e-4, rtol=1e-4)

    print("KERNEL_OK")
</pallas_src>

<mosaic_0001>
module attributes {stable_mosaic.version = 11 : i64} {
  func.func @_swish_kernel(%arg0: memref<16x128xf32, #tpu.memory_space<vmem>>, %arg1: memref<16x128xf32, #tpu.memory_space<vmem>>) attributes {dimension_semantics = [], scalar_prefetch = 0 : i64, scratch_operands = 0 : i64, tpu.core_type = #tpu.core_type<tc>} {
    %c0 = arith.constant 0 : index
    %c0_0 = arith.constant 0 : index
    %0 = vector.load %arg0[%c0, %c0_0] : memref<16x128xf32, #tpu.memory_space<vmem>>, vector<16x128xf32>
    %cst = arith.constant 5.000000e-01 : f32
    %1 = vector.broadcast %cst : f32 to vector<16x128xf32>
    %2 = arith.mulf %1, %0 : vector<16x128xf32>
    %3 = math.tanh %2 : vector<16x128xf32>
    %cst_1 = arith.constant 5.000000e-01 : f32
    %4 = vector.broadcast %cst_1 : f32 to vector<16x128xf32>
    %5 = arith.mulf %4, %3 : vector<16x128xf32>
    %cst_2 = arith.constant 5.000000e-01 : f32
    %6 = vector.broadcast %cst_2 : f32 to vector<16x128xf32>
    %7 = arith.addf %5, %6 : vector<16x128xf32>
    %8 = arith.mulf %0, %7 : vector<16x128xf32>
    %c0_3 = arith.constant 0 : index
    %c0_4 = arith.constant 0 : index
    %9 = vector.load %arg1[%c0_3, %c0_4] : memref<16x128xf32, #tpu.memory_space<vmem>>, vector<16x128xf32>
    tpu.vector_store %arg1[%c0_3, %c0_4], %8 {strides = array<i32>} : memref<16x128xf32, #tpu.memory_space<vmem>>, vector<16x128xf32>,
    return
  }
}

</mosaic_0001>

<llo_original>
// kernel: tpu_custom_call.1
$region0: #{tpu_custom_call.1}
  #allocation0 [shape = 'u32[]', space=smem, size = 0x4, offset = 0x4, fixed_abs, tag = 'smem constant byte address 0x4 - core index']
  #allocation1 [shape = 'u32[144,128]{1,0:T(1,128)}', space=vmem, size = 0x12000, scoped, tag = 'internal scratch']
  %s0 = inlined_call_operand.hbm [shape: f32[16,128], index: 0, kind: input, shape index: {}]
  %s1 = inlined_call_operand.hbm [shape: f32[16,128], index: 1, kind: output, shape index: {}]
  %s2 = sld [smem:[#allocation0]]
  $region18: #{tpu_custom_call.1} parent=0
    _
  %s4 = ssub.s32 1, %s2
  %s5 = scalar_select 0, %s4, %s2
  $region1: #{tpu_custom_call.1} parent=0
    #allocation2 [shape = 'u8[8192]{0}', space=vmem, size = 0x2000, scoped, tag = 'input window, operand 0, single buffered']
    #allocation3 [shape = 's32[1]{0}', space=sflag, size = 0x4, scoped, tag = 'scoped memory for tpu_custom_call.1']
    #allocation4 [shape = 's32[1]{0}', space=sflag, size = 0x4, scoped, tag = 'scoped memory for tpu_custom_call.1']
    #allocation5 [shape = 'u8[8192]{0}', space=vmem, size = 0x2000, scoped, tag = 'output window, operand 0, single buffered']
    %6 = vsyncpa [#allocation3], 0
    %7 = vsyncpa [#allocation4], 0
    // Predicated region
    $region2: #{tpu_custom_call.1} parent=1 // pred_check
      _
    $region3: #{tpu_custom_call.1} parent=1 // pred_check_branch
      %9 = sbr.rel (0) target = $region5
    $region4: #{tpu_custom_call.1} parent=1 // pred_region
      %s11 = ssub.s32 256, 256
      %12 = vsyncadd [#allocation3], %s11
      %s13 = sshll.u32 [#allocation2], 4
      %s14 = int_to_ptr.vmem [resolvable:$true] %s13
      %19 = dma.hbm_to_vmem [thread:$0]  %s0, 256, %s14, [#allocation3], 128, 128, 8
    $region5: #{tpu_custom_call.1} parent=1 // pred_fallthru
      _
    // Predicated region
    $region6: #{tpu_custom_call.1} parent=1 // pred_check
      _
    $region7: #{tpu_custom_call.1} parent=1 // pred_check_branch
      %21 = sbr.rel (0) target = $region9
    $region8: #{tpu_custom_call.1} parent=1 // pred_region
      %22 = dma.done [#allocation3], 256
    $region9: #{tpu_custom_call.1} parent=1 // pred_fallthru
      _
    %v23 = vld [vmem:[#allocation2] sm:$0xff]
    %v24 = vld [vmem:[#allocation2 + $0x8] sm:$0xff]
    %v25 = vmul.f32 %v23, 0.5
    %v26 = vmul.f32 %v24, 0.5
    %v27 = vtanh.pop %v25
    %v28 = vtanh.pop %v26
    %v29 = vmul.f32 %v27, 0.5
    %v30 = vmul.f32 %v28, 0.5
    %v31 = vadd.f32 %v29, 0.5
    %v32 = vadd.f32 %v30, 0.5
    %v33 = vmul.f32 %v23, %v31
    %v34 = vmul.f32 %v24, %v32
    %35 = vst [vmem:[#allocation5] sm:$0xff] %v33
    %36 = vst [vmem:[#allocation5 + $0x8] sm:$0xff] %v34
    // Predicated region
    $region10: #{tpu_custom_call.1} parent=1 // pred_check
      _
    $region11: #{tpu_custom_call.1} parent=1 // pred_check_branch
      %38 = sbr.rel (0) target = $region13
    $region12: #{tpu_custom_call.1} parent=1 // pred_region
      %s40 = ssub.s32 256, 256
      %41 = vsyncadd [#allocation4], %s40
      %s42 = sshll.u32 [#allocation5], 4
      %s43 = int_to_ptr.vmem [resolvable:$true] %s42
      %48 = dma.vmem_to_hbm [thread:$0]  %s43, 256, %s1, [#allocation4], 128, 128, 8
    $region13: #{tpu_custom_call.1} parent=1 // pred_fallthru
      _
    // Predicated region
    $region14: #{tpu_custom_call.1} parent=1 // pred_check
      _
    $region15: #{tpu_custom_call.1} parent=1 // pred_check_branch
      %50 = sbr.rel (0) target = $region17
    $region16: #{tpu_custom_call.1} parent=1 // pred_region
      %51 = dma.done [#allocation4], 256
    $region17: #{tpu_custom_call.1} parent=1 // pred_fallthru
      _
    %52 = vsyncpa [#allocation3], 1
    %53 = vsyncpa [#allocation4], 1

</llo_original>
